<compile_context>
chip_gen: v6e
topology: v6e:2x2x1
jax: 0.10.0
libtpu: 0.0.40
codegen_flags: <defaults>
</compile_context>

<pallas_src>
import jax
import jax.numpy as jnp
from jax.experimental import pallas as pl
from jax.experimental.pallas import tpu as pltpu

# ---- module constants (mirrors knight.py) ----
KEY_POSSIBLES = 7
MOUSE_BUTTON_POSSIBLES = 3
MOUSE_X_POSSIBLES = 23
MOUSE_Y_POSSIBLES = 15
N_ACTIONS = KEY_POSSIBLES + MOUSE_BUTTON_POSSIBLES + MOUSE_X_POSSIBLES + MOUSE_Y_POSSIBLES  # 48
DIM_PHI = N_ACTIONS          # 48
NN_WIDTH = N_ACTIONS         # 48
IN_FEATURES = N_ACTIONS * 4  # 192

N_PAD = 128                  # lane-dense padded hidden/output width (one lane tile)
TB_MAX = 1024                # max batch-tile rows per grid step (mem-bound sweet spot)
SUBLANE = 16                 # bf16 sublane packing (also a multiple of f32's 8)


def _round_up(x, m):
    return ((x + m - 1) // m) * m


def _choose_tb(batch):
    """Pick the batch-tile size.

    * batch <= 16: single block equal to the full array dims (legal for any size,
      no padding waste; the module's B == 1 path lands here).
    * otherwise: aim for >= 2 grid steps (both v7x TCs get work) with tiles up to
      TB_MAX rows, rounded to the bf16 sublane multiple. The ragged last tile is
      handled by Pallas boundary clamping — no wrapper-side jnp.pad.
    """
    if batch <= SUBLANE:
        return batch
    half = -(-batch // 2)                      # ceil(batch / 2)
    return min(TB_MAX, _round_up(half, SUBLANE))


def phi_kernel(x_ref, w1_ref, b1_ref, w2_ref, b2_ref, o_ref):
    """Fused fc1 -> ELU -> (dropout = identity) -> fc2 on a (tb, 192) activation tile.

    Refs: x (tb, 192) bf16, w1 (192, 128) bf16, b1 (1, 128) f32, w2 (128, 128) bf16,
    b2 (1, 128) f32, out (tb, 128) bf16. Padded weight columns/rows are zero, so
    ELU(0) = 0 keeps them zero and output columns 48..127 are exactly zero.
    """
    x = x_ref[...]
    # fc1: (tb, 192) @ (192, 128) -> f32 accumulator, + f32 bias.
    h = jnp.dot(x, w1_ref[...], preferred_element_type=jnp.float32) + b1_ref[...]
    # ELU (alpha = 1.0): h if h > 0 else exp(h) - 1. Clamp the exp argument so the
    # discarded positive branch never overflows.
    h = jnp.where(h > 0, h, jnp.exp(jnp.minimum(h, 0.0)) - 1.0)
    # dropout(p=0.5): identity in eval mode.
    # TODO(synk): training-mode dropout (prng mask + 1/(1-p) scale) not implemented.
    h = h.astype(w2_ref.dtype)   # bf16 operands -> single-pass MXU matmul
    # fc2: (tb, 128) @ (128, 128) -> f32 accumulator, + f32 bias.
    out = jnp.dot(h, w2_ref[...], preferred_element_type=jnp.float32) + b2_ref[...]
    o_ref[...] = out.astype(o_ref.dtype)       # full 128-lane store


def pad_params(w1, b1, w2, b2, *, param_dtype=jnp.bfloat16):
    """One-time lane-dense zero padding (48 -> 128 columns) + dtype cast.

    Weights are stored in `param_dtype` (bf16 by default: the kernel is HBM-bound so
    halving weight/activation bytes is the dominant win); biases stay f32 (tiny, and
    added directly to the f32 accumulator).

    Args (PyTorch-transposed layout):
      w1 (192, 48), b1 (48,), w2 (48, 48), b2 (48,)
    Returns:
      w1p (192, 128), b1p (1, 128) f32, w2p (128, 128), b2p (1, 128) f32
    """
    w1p = jnp.zeros((IN_FEATURES, N_PAD), param_dtype).at[:, :NN_WIDTH].set(
        jnp.asarray(w1, param_dtype))
    b1p = jnp.zeros((1, N_PAD), jnp.float32).at[0, :NN_WIDTH].set(
        jnp.asarray(b1, jnp.float32))
    w2p = jnp.zeros((N_PAD, N_PAD), param_dtype).at[:NN_WIDTH, :DIM_PHI].set(
        jnp.asarray(w2, param_dtype))
    b2p = jnp.zeros((1, N_PAD), jnp.float32).at[0, :DIM_PHI].set(
        jnp.asarray(b2, jnp.float32))
    return w1p, b1p, w2p, b2p


def phi_model_forward(x, w1p, b1p, w2p, b2p, *, act_dtype=jnp.bfloat16,
                      return_padded=False):
    """Batched forward. `x` is reshaped to (B, 192); the PyTorch module is B == 1.

    Args:
      x: any array with B*192 elements (module case: 192 elements -> B = 1)
      w1p/b1p/w2p/b2p: lane-dense padded params from pad_params()
      act_dtype: activation/output dtype (bf16 default; HBM-bound kernel)
      return_padded: if True, return the lane-dense (B, 128) output (columns 48..127
        are exactly zero) and skip the extra HBM pass of the [:, :48] slice — preferred
        when the consumer can pad its own weights instead.
    Returns:
      (B, 48) — or (B, 128) if return_padded — in act_dtype.
    """
    x2 = jnp.asarray(x).reshape(-1, IN_FEATURES).astype(act_dtype)
    batch = x2.shape[0]
    tb = _choose_tb(batch)
    grid_b = pl.cdiv(batch, tb)     # ragged tail handled by Pallas boundary clamping

    act_bytes = x2.dtype.itemsize
    weight_bytes = sum(int(a.size) * a.dtype.itemsize for a in (w1p, b1p, w2p, b2p))
    cost = pl.CostEstimate(
        flops=2 * batch * (IN_FEATURES * N_PAD + N_PAD * N_PAD),
        transcendentals=batch * N_PAD,                      # exp in ELU
        bytes_accessed=batch * (IN_FEATURES + N_PAD) * act_bytes + weight_bytes,
    )

    out = pl.pallas_call(
        phi_kernel,
        out_shape=jax.ShapeDtypeStruct((batch, N_PAD), act_dtype),
        grid_spec=pl.GridSpec(
            grid=(grid_b,),
            in_specs=[
                # Activations: tile over the batch axis.
                pl.BlockSpec((tb, IN_FEATURES), lambda i: (i, 0)),
                # Weights/biases: full-array blocks with constant index maps ->
                # DMA'd once, VMEM-resident across all batch grid steps.
                # (pipeline_mode=pl.Buffered(1) would also drop the redundant second
                #  buffer; omitted — negligible vs the VMEM budget here.)
                pl.BlockSpec((IN_FEATURES, N_PAD), lambda i: (0, 0)),
                pl.BlockSpec((1, N_PAD), lambda i: (0, 0)),
                pl.BlockSpec((N_PAD, N_PAD), lambda i: (0, 0)),
                pl.BlockSpec((1, N_PAD), lambda i: (0, 0)),
            ],
            out_specs=pl.BlockSpec((tb, N_PAD), lambda i: (i, 0)),
        ),
        compiler_params=pltpu.CompilerParams(
            # Batch tiles are independent -> v7x's two TensorCores split them.
            dimension_semantics=("parallel",),
        ),
        cost_estimate=cost,
    )(x2, w1p, b1p, w2p, b2p)

    if return_padded:
        return out                  # (B, 128); columns 48..127 are exactly zero
    return out[:, :DIM_PHI]


def init_params(key):
    """Deterministic parameter init matching PyTorch Linear shapes.

    PyTorch: fc1.weight (48, 192), fc1.bias (48,), fc2.weight (48, 48), fc2.bias (48,)
    We store weights transposed: w1 (192, 48), w2 (48, 48).
    """
    k1, k2, k3, k4 = jax.random.split(key, 4)
    bound1 = 1.0 / jnp.sqrt(IN_FEATURES)
    bound2 = 1.0 / jnp.sqrt(NN_WIDTH)
    w1 = jax.random.uniform(k1, (IN_FEATURES, NN_WIDTH), jnp.float32, -bound1, bound1)
    b1 = jax.random.uniform(k2, (NN_WIDTH,), jnp.float32, -bound1, bound1)
    w2 = jax.random.uniform(k3, (NN_WIDTH, DIM_PHI), jnp.float32, -bound2, bound2)
    b2 = jax.random.uniform(k4, (DIM_PHI,), jnp.float32, -bound2, bound2)
    return w1, b1, w2, b2


if __name__ == "__main__":
    key = jax.random.PRNGKey(0)
    kx, kb, kp = jax.random.split(key, 3)

    w1, b1, w2, b2 = init_params(kp)
    w1p, b1p, w2p, b2p = pad_params(w1, b1, w2, b2)   # one-time lane-dense pad + bf16

    def _elu(h):
        return jnp.where(h > 0, h, jnp.exp(jnp.minimum(h, 0.0)) - 1.0)

    def ref_forward(xr):
        x2 = jnp.asarray(xr, jnp.float32).reshape(-1, IN_FEATURES)
        h = _elu(x2 @ w1 + b1[None, :])
        return h @ w2 + b2[None, :]

    # Case 1: module-consistent single activation — 4 action vectors of size 48,
    # reshaped to (1, 192) exactly like PhiModel.forward. Uses a single full-array
    # block (tb = 1), so no 256x padding waste.
    x_single = jax.random.normal(kx, (4, N_ACTIONS), dtype=jnp.float32)
    out1 = jax.block_until_ready(phi_model_forward(x_single, w1p, b1p, w2p, b2p))
    assert out1.shape == (1, DIM_PHI), out1.shape
    assert jnp.allclose(out1.astype(jnp.float32), ref_forward(x_single),
                        atol=3e-2, rtol=3e-2), "single-activation mismatch vs reference"

    # Case 2: batched activations (200 rows -> tb = 112, 2 grid steps, ragged last
    # tile handled in-kernel — no wrapper jnp.pad; VMEM-resident weights).
    x_batch = jax.random.normal(kb, (200, IN_FEATURES), dtype=jnp.float32)
    out2 = jax.block_until_ready(phi_model_forward(x_batch, w1p, b1p, w2p, b2p))
    assert out2.shape == (200, DIM_PHI), out2.shape
    assert jnp.allclose(out2.astype(jnp.float32), ref_forward(x_batch),
                        atol=3e-2, rtol=3e-2), "batched mismatch vs reference"

    # Case 3: lane-dense padded output path (no wrapper [:, :48] slice); padded
    # columns are exactly zero so a padded-weight consumer can use it directly.
    out3 = jax.block_until_ready(
        phi_model_forward(x_batch, w1p, b1p, w2p, b2p, return_padded=True))
    assert out3.shape == (200, N_PAD), out3.shape
    assert bool(jnp.all(out3[:, DIM_PHI:] == 0)), "padded output columns not zero"

    print("KERNEL_OK")
</pallas_src>

<mosaic_0001>
module attributes {stable_mosaic.version = 11 : i64} {
  func.func @phi_kernel(%arg0: i32, %arg1: memref<1x192xbf16, #tpu.memory_space<vmem>>, %arg2: memref<192x128xbf16, #tpu.memory_space<vmem>>, %arg3: memref<1x128xf32, #tpu.memory_space<vmem>>, %arg4: memref<128x128xbf16, #tpu.memory_space<vmem>>, %arg5: memref<1x128xf32, #tpu.memory_space<vmem>>, %arg6: memref<1x128xbf16, #tpu.memory_space<vmem>>) attributes {dimension_semantics = [#tpu.dimension_semantics<parallel>], iteration_bounds = array<i64: 1>, scalar_prefetch = 0 : i64, scratch_operands = 0 : i64, tpu.core_type = #tpu.core_type<tc>, window_params = [{transform_indices = @transform_0, window_bounds = array<i64: 1, 192>}, {pipeline_mode = #tpu.pipeline_mode<synchronous>, transform_indices = @transform_1, window_bounds = array<i64: 192, 128>}, {pipeline_mode = #tpu.pipeline_mode<synchronous>, transform_indices = @transform_2, window_bounds = array<i64: 1, 128>}, {pipeline_mode = #tpu.pipeline_mode<synchronous>, transform_indices = @transform_3, window_bounds = array<i64: 128, 128>}, {pipeline_mode = #tpu.pipeline_mode<synchronous>, transform_indices = @transform_4, window_bounds = array<i64: 1, 128>}, {transform_indices = @transform_5, window_bounds = array<i64: 1, 128>}]} {
    %c0 = arith.constant 0 : index
    %c0_0 = arith.constant 0 : index
    %0 = vector.load %arg1[%c0, %c0_0] : memref<1x192xbf16, #tpu.memory_space<vmem>>, vector<1x192xbf16>
    %c0_1 = arith.constant 0 : index
    %c0_2 = arith.constant 0 : index
    %1 = vector.load %arg2[%c0_1, %c0_2] : memref<192x128xbf16, #tpu.memory_space<vmem>>, vector<192x128xbf16>
    %cst = arith.constant dense<0.000000e+00> : vector<1x128xf32>
    %2 = tpu.matmul %0, %1, %cst {dimension_numbers = #tpu.dot_dimension_numbers<[1], [0], [0], [1], [0, 0, 1, 1], [], []>} : vector<1x192xbf16>, vector<192x128xbf16>, vector<1x128xf32> -> vector<1x128xf32>
    %c0_3 = arith.constant 0 : index
    %c0_4 = arith.constant 0 : index
    %3 = vector.load %arg3[%c0_3, %c0_4] : memref<1x128xf32, #tpu.memory_space<vmem>>, vector<1x128xf32>
    %4 = arith.addf %2, %3 : vector<1x128xf32>
    %cst_5 = arith.constant 0.000000e+00 : f32
    %5 = vector.broadcast %cst_5 : f32 to vector<1x128xf32>
    %6 = arith.cmpf ogt, %4, %5 : vector<1x128xf32>
    %cst_6 = arith.constant 0.000000e+00 : f32
    %7 = vector.broadcast %cst_6 : f32 to vector<1x128xf32>
    %8 = arith.minimumf %4, %7 : vector<1x128xf32>
    %9 = math.exp %8 : vector<1x128xf32>
    %cst_7 = arith.constant 1.000000e+00 : f32
    %10 = vector.broadcast %cst_7 : f32 to vector<1x128xf32>
    %11 = arith.subf %9, %10 : vector<1x128xf32>
    %12 = arith.select %6, %4, %11 : vector<1x128xi1>, vector<1x128xf32>
    %13 = arith.truncf %12 : vector<1x128xf32> to vector<1x128xbf16>
    %c0_8 = arith.constant 0 : index
    %c0_9 = arith.constant 0 : index
    %14 = vector.load %arg4[%c0_8, %c0_9] : memref<128x128xbf16, #tpu.memory_space<vmem>>, vector<128x128xbf16>
    %cst_10 = arith.constant dense<0.000000e+00> : vector<1x128xf32>
    %15 = tpu.matmul %13, %14, %cst_10 {dimension_numbers = #tpu.dot_dimension_numbers<[1], [0], [0], [1], [0, 0, 1, 1], [], []>} : vector<1x128xbf16>, vector<128x128xbf16>, vector<1x128xf32> -> vector<1x128xf32>
    %c0_11 = arith.constant 0 : index
    %c0_12 = arith.constant 0 : index
    %16 = vector.load %arg5[%c0_11, %c0_12] : memref<1x128xf32, #tpu.memory_space<vmem>>, vector<1x128xf32>
    %17 = arith.addf %15, %16 : vector<1x128xf32>
    %18 = arith.truncf %17 : vector<1x128xf32> to vector<1x128xbf16>
    %c0_13 = arith.constant 0 : index
    %c0_14 = arith.constant 0 : index
    %19 = vector.load %arg6[%c0_13, %c0_14] : memref<1x128xbf16, #tpu.memory_space<vmem>>, vector<1x128xbf16>
    tpu.vector_store %arg6[%c0_13, %c0_14], %18 {strides = array<i32>} : memref<1x128xbf16, #tpu.memory_space<vmem>>, vector<1x128xbf16>,
    return
  }
  func.func @transform_0(%arg0: i32) -> (i32, i32) {
    %c0_i32 = arith.constant 0 : i32
    %c0_i32_0 = arith.constant 0 : i32
    return %arg0, %c0_i32 : i32, i32
  }
  func.func @transform_1(%arg0: i32) -> (i32, i32) {
    %c0_i32 = arith.constant 0 : i32
    %c0_i32_0 = arith.constant 0 : i32
    %c0_i32_1 = arith.constant 0 : i32
    return %c0_i32, %c0_i32_0 : i32, i32
  }
  func.func @transform_2(%arg0: i32) -> (i32, i32) {
    %c0_i32 = arith.constant 0 : i32
    %c0_i32_0 = arith.constant 0 : i32
    %c0_i32_1 = arith.constant 0 : i32
    return %c0_i32, %c0_i32_0 : i32, i32
  }
  func.func @transform_3(%arg0: i32) -> (i32, i32) {
    %c0_i32 = arith.constant 0 : i32
    %c0_i32_0 = arith.constant 0 : i32
    %c0_i32_1 = arith.constant 0 : i32
    return %c0_i32, %c0_i32_0 : i32, i32
  }
  func.func @transform_4(%arg0: i32) -> (i32, i32) {
    %c0_i32 = arith.constant 0 : i32
    %c0_i32_0 = arith.constant 0 : i32
    %c0_i32_1 = arith.constant 0 : i32
    return %c0_i32, %c0_i32_0 : i32, i32
  }
  func.func @transform_5(%arg0: i32) -> (i32, i32) {
    %c0_i32 = arith.constant 0 : i32
    %c0_i32_0 = arith.constant 0 : i32
    return %arg0, %c0_i32 : i32, i32
  }
}

</mosaic_0001>

<llo_original>
// kernel: tpu_custom_call.1
$region0: #{tpu_custom_call.1}
  #allocation0 [shape = 'u32[]', space=smem, size = 0x4, offset = 0x4, fixed_abs, tag = 'smem constant byte address 0x4 - core index']
  #allocation1 [shape = 'u32[144,128]{1,0:T(1,128)}', space=vmem, size = 0x12000, scoped, tag = 'internal scratch']
  %s0 = inlined_call_operand.hbm [shape: bf16[1,192], index: 0, kind: input, shape index: {}]
  %s1 = inlined_call_operand.hbm [shape: bf16[192,128], index: 1, kind: input, shape index: {}]
  %s2 = inlined_call_operand.vmem [shape: f32[1,128], index: 2, kind: input, shape index: {}]
  %s3 = inlined_call_operand.hbm [shape: bf16[128,128], index: 3, kind: input, shape index: {}]
  %s4 = inlined_call_operand.vmem [shape: f32[1,128], index: 4, kind: input, shape index: {}]
  %s5 = inlined_call_operand.hbm [shape: bf16[1,128], index: 5, kind: output, shape index: {}]
  %s6 = sld [smem:[#allocation0]]
  $region42: #{tpu_custom_call.1} parent=0
    _
  %s8 = ssub.s32 1, %s6
  %s9 = scalar_select 0, %s8, %s6
  $region1: #{tpu_custom_call.1} parent=0
    #allocation2 [shape = 'u8[1024]{0}', space=vmem, size = 0x400, scoped, tag = 'input window, operand 0, single buffered']
    #allocation3 [shape = 's32[1]{0}', space=sflag, size = 0x4, scoped, tag = 'scoped memory for tpu_custom_call.1']
    #allocation4 [shape = 's32[1]{0}', space=sflag, size = 0x4, scoped, tag = 'scoped memory for tpu_custom_call.1']
    #allocation5 [shape = 'u8[49152]{0}', space=vmem, size = 0xc000, scoped, tag = 'input window, operand 1, single buffered']
    #allocation6 [shape = 's32[1]{0}', space=sflag, size = 0x4, scoped, tag = 'scoped memory for tpu_custom_call.1']
    #allocation7 [shape = 'u8[32768]{0}', space=vmem, size = 0x8000, scoped, tag = 'input window, operand 3, single buffered']
    #allocation8 [shape = 'u8[512]{0}', space=vmem, size = 0x400, scoped, tag = 'output window, operand 0, single buffered']
    %10 = vsyncpa [#allocation3], 0
    %11 = vsyncpa [#allocation6], 0
    %12 = vsyncpa [#allocation4], 0
    // Predicated region
    $region2: #{tpu_custom_call.1} parent=1 // pred_check
      _
    $region3: #{tpu_custom_call.1} parent=1 // pred_check_branch
      %14 = sbr.rel (0) target = $region5
    $region4: #{tpu_custom_call.1} parent=1 // pred_region
      %s16 = ssub.s32 32, 32
      %17 = vsyncadd [#allocation3], %s16
      %s19 = sshll.u32 [#allocation2], 4
      %s20 = int_to_ptr.vmem [resolvable:$true] %s19
      %22 = dma.hbm_to_vmem [thread:$0]  %s0, 32, %s20, [#allocation3]
    $region5: #{tpu_custom_call.1} parent=1 // pred_fallthru
      _
    // Predicated region
    $region6: #{tpu_custom_call.1} parent=1 // pred_check
      _
    $region7: #{tpu_custom_call.1} parent=1 // pred_check_branch
      %24 = sbr.rel (0) target = $region9
    $region8: #{tpu_custom_call.1} parent=1 // pred_region
      %s26 = ssub.s32 1536, 1536
      %27 = vsyncadd [#allocation6], %s26
      %s28 = sshll.u32 [#allocation5], 4
      %s29 = int_to_ptr.vmem [resolvable:$true] %s28
      %34 = dma.hbm_to_vmem [thread:$0]  %s1, 1536, %s29, [#allocation6], 64, 64, 4
    $region9: #{tpu_custom_call.1} parent=1 // pred_fallthru
      _
    // Predicated region
    $region10: #{tpu_custom_call.1} parent=1 // pred_check
      _
    $region11: #{tpu_custom_call.1} parent=1 // pred_check_branch
      %36 = sbr.rel (0) target = $region13
    $region12: #{tpu_custom_call.1} parent=1 // pred_region
      _
    $region13: #{tpu_custom_call.1} parent=1 // pred_fallthru
      _
    // Predicated region
    $region14: #{tpu_custom_call.1} parent=1 // pred_check
      _
    $region15: #{tpu_custom_call.1} parent=1 // pred_check_branch
      %38 = sbr.rel (0) target = $region17
    $region16: #{tpu_custom_call.1} parent=1 // pred_region
      %s40 = ssub.s32 1024, 1024
      %41 = vsyncadd [#allocation6], %s40
      %s42 = sshll.u32 [#allocation7], 4
      %s43 = int_to_ptr.vmem [resolvable:$true] %s42
      %48 = dma.hbm_to_vmem [thread:$0]  %s3, 1024, %s43, [#allocation6], 64, 64, 4
    $region17: #{tpu_custom_call.1} parent=1 // pred_fallthru
      _
    // Predicated region
    $region18: #{tpu_custom_call.1} parent=1 // pred_check
      _
    $region19: #{tpu_custom_call.1} parent=1 // pred_check_branch
      %50 = sbr.rel (0) target = $region21
    $region20: #{tpu_custom_call.1} parent=1 // pred_region
      _
    $region21: #{tpu_custom_call.1} parent=1 // pred_fallthru
      _
    // Predicated region
    $region22: #{tpu_custom_call.1} parent=1 // pred_check
      _
    $region23: #{tpu_custom_call.1} parent=1 // pred_check_branch
      %52 = sbr.rel (0) target = $region25
    $region24: #{tpu_custom_call.1} parent=1 // pred_region
      %53 = dma.done [#allocation3], 32
    $region25: #{tpu_custom_call.1} parent=1 // pred_fallthru
      _
    // Predicated region
    $region26: #{tpu_custom_call.1} parent=1 // pred_check
      _
    $region27: #{tpu_custom_call.1} parent=1 // pred_check_branch
      %55 = sbr.rel (0) target = $region29
    $region28: #{tpu_custom_call.1} parent=1 // pred_region
      %56 = dma.done [#allocation6], 1536
    $region29: #{tpu_custom_call.1} parent=1 // pred_fallthru
      _
    // Predicated region
    $region30: #{tpu_custom_call.1} parent=1 // pred_check
      _
    $region31: #{tpu_custom_call.1} parent=1 // pred_check_branch
      %58 = sbr.rel (0) target = $region33
    $region32: #{tpu_custom_call.1} parent=1 // pred_region
      %59 = dma.done [#allocation6], 1024
    $region33: #{tpu_custom_call.1} parent=1 // pred_fallthru
      _
    %v61 = vld [vmem:[#allocation2] sm:$0x3]
    %v62 = vld [vmem:[#allocation5] sm:$0xf]
    %v63 = vld [vmem:[#allocation5 + $0x4] sm:$0xf]
    %v64 = vld [vmem:[#allocation5 + $0x8] sm:$0xf]
    %v65 = vld [vmem:[#allocation5 + $0xc] sm:$0xf]
    %v66 = vld [vmem:[#allocation5 + $0x10] sm:$0xf]
    %v67 = vld [vmem:[#allocation5 + $0x14] sm:$0xf]
    %v68 = vld [vmem:[#allocation5 + $0x18] sm:$0xf]
    %v69 = vld [vmem:[#allocation5 + $0x1c] sm:$0xf]
    %v70 = vld [vmem:[#allocation5 + $0x20] sm:$0xf]
    %v71 = vld [vmem:[#allocation5 + $0x24] sm:$0xf]
    %v72 = vld [vmem:[#allocation5 + $0x28] sm:$0xf]
    %v73 = vld [vmem:[#allocation5 + $0x2c] sm:$0xf]
    %v74 = vld [vmem:[#allocation5 + $0x30] sm:$0xf]
    %v75 = vld [vmem:[#allocation5 + $0x34] sm:$0xf]
    %v76 = vld [vmem:[#allocation5 + $0x38] sm:$0xf]
    %v77 = vld [vmem:[#allocation5 + $0x3c] sm:$0xf]
    %v78 = vld [vmem:[#allocation5 + $0x40] sm:$0xf]
    %v79 = vld [vmem:[#allocation5 + $0x44] sm:$0xf]
    %v80 = vld [vmem:[#allocation5 + $0x48] sm:$0xf]
    %v81 = vld [vmem:[#allocation5 + $0x4c] sm:$0xf]
    %v82 = vld [vmem:[#allocation5 + $0x50] sm:$0xf]
    %v83 = vld [vmem:[#allocation5 + $0x54] sm:$0xf]
    %v84 = vld [vmem:[#allocation5 + $0x58] sm:$0xf]
    %v85 = vld [vmem:[#allocation5 + $0x5c] sm:$0xf]
    %v86 = vld [vmem:[%s2] sm:$0x1]
    %v89 = vunpack.c.l.s4 1966171168
    %v90 = vunpack.c.0.s8 %v89
    %v91 = vlaneseq
    %v92 = vshrl.u32 %v91, 7
    %v93 = vsub.s32 %v90, %v92
    %v94 = vrot.slane %v61, %v93
    %v95 = vcombine.high %v94, %v94
    %v97 = vunpack.c.l.s4 1966171168
    %v98 = vunpack.c.0.s8 %v97
    %v99 = vlaneseq
    %v100 = vshrl.u32 %v99, 7
    %v101 = vsub.s32 %v98, %v100
    %v102 = vrot.slane %v94, %v101
    %v104 = vunpack.c.l.s4 1966171168
    %v105 = vunpack.c.0.s8 %v104
    %v106 = vlaneseq
    %v107 = vshrl.u32 %v106, 7
    %v108 = vsub.s32 %v105, %v107
    %v109 = vrot.slane %v95, %v108
    %v135 = vunpack.c.l.b16 %v62
    %v136 = vunpack.c.l.b16 %v63
    %v137 = vunpack.c.l.b16 %v64
    %v138 = vunpack.c.l.b16 %v65
    %v139 = vunpack.c.l.b16 %v66
    %v140 = vunpack.c.l.b16 %v67
    %v141 = vunpack.c.l.b16 %v68
    %v142 = vunpack.c.l.b16 %v69
    %v143 = vunpack.c.l.b16 %v70
    %v144 = vunpack.c.l.b16 %v71
    %v145 = vunpack.c.l.b16 %v72
    %v146 = vunpack.c.l.b16 %v73
    %v147 = vunpack.c.l.b16 %v74
    %v148 = vunpack.c.l.b16 %v75
    %v149 = vunpack.c.l.b16 %v76
    %v150 = vunpack.c.l.b16 %v77
    %v151 = vunpack.c.l.b16 %v78
    %v152 = vunpack.c.l.b16 %v79
    %v153 = vunpack.c.l.b16 %v80
    %v154 = vunpack.c.l.b16 %v81
    %v155 = vunpack.c.l.b16 %v82
    %v156 = vunpack.c.l.b16 %v83
    %v157 = vunpack.c.l.b16 %v84
    %v158 = vunpack.c.l.b16 %v85
    %v159 = vpack.c.b16 %v136, %v135
    %v160 = vpack.c.b16 %v138, %v137
    %v161 = vpack.c.b16 %v140, %v139
    %v162 = vpack.c.b16 %v142, %v141
    %v163 = vpack.c.b16 %v144, %v143
    %v164 = vpack.c.b16 %v146, %v145
    %v165 = vpack.c.b16 %v148, %v147
    %v166 = vpack.c.b16 %v150, %v149
    %v167 = vpack.c.b16 %v152, %v151
    %v168 = vpack.c.b16 %v154, %v153
    %v169 = vpack.c.b16 %v156, %v155
    %v170 = vpack.c.b16 %v158, %v157
    %vm183 = vcmask 523264
    %v185 = vsel %vm183, %v109, 0
    %187 = vmatprep.subr.bf16.mxu0 0
    %188 = vmatpush1.bf16.msra.mxu0 %v166
    %189 = vmatprep.subr.bf16.mxu0 0
    %190 = vmatpush1.bf16.msra.mxu0 %v165
    %191 = vmatprep.subr.bf16.mxu0 0
    %192 = vmatpush1.bf16.msra.mxu0 %v164
    %193 = vmatprep.subr.bf16.mxu0 0
    %194 = vmatpush1.bf16.msra.mxu0 %v163
    %195 = vmatprep.subr.bf16.mxu0 0
    %196 = vmatpush1.bf16.msra.mxu0 %v162
    %197 = vmatprep.subr.bf16.mxu0 0
    %198 = vmatpush1.bf16.msra.mxu0 %v161
    %199 = vmatprep.subr.bf16.mxu0 0
    %200 = vmatpush1.bf16.msra.mxu0 %v160
    %201 = vmatprep.subr.bf16.mxu0 0
    %202 = vmatpush1.bf16.msra.mxu0 %v159
    %203 = vmatprep.subr.bf16.mxu0 0
    %204 = vmatpush2.bf16.msra.mxu0 0
    %205 = vmatprep.subr.bf16.mxu0 0
    %206 = vmatpush2.bf16.msra.mxu0 0
    %207 = vmatprep.subr.bf16.mxu0 0
    %208 = vmatpush2.bf16.msra.mxu0 0
    %209 = vmatprep.subr.bf16.mxu0 0
    %210 = vmatpush2.bf16.msra.mxu0 0
    %211 = vmatprep.subr.bf16.mxu0 0
    %212 = vmatpush2.bf16.msra.mxu0 %v170
    %213 = vmatprep.subr.bf16.mxu0 0
    %214 = vmatpush2.bf16.msra.mxu0 %v169
    %215 = vmatprep.subr.bf16.mxu0 0
    %216 = vmatpush2.bf16.msra.mxu0 %v168
    %217 = vmatprep.subr.bf16.mxu0 0
    %218 = vmatpush2.bf16.msra.mxu0 %v167
    %219 = vmatprep.mubr.bf16.mxu0 %v185
    %220 = vmatmul.mubr.bf16.gmra.mxu0 %v102
    %v221 = vpop.f32.mrf.mxu0
    %v222 = vadd.f32 %v86, %v221
    %v223 = vpop.f32.mrf.mxu0
    %v224 = vpop.f32.mrf.mxu0
    %v225 = vpop.f32.mrf.mxu0
    %226 = vdwg.mxu0
    %vm227 = vcmp.gt.f32.partialorder %v222, 0.0
    %v228 = vmin.f32 %v222, 0.0
    %v229 = vmul.f32 %v228, 1.442695
    %v230 = vpow.pop %v229
    %v231 = vsub.f32 %v230, 1.0
    %v232 = vsel %vm227, %v222, %v231
    %v233 = vpack.c.bf16 %v232, %v232
    %v234 = vld [vmem:[#allocation7] sm:$0xf]
    %v235 = vld [vmem:[#allocation7 + $0x4] sm:$0xf]
    %v236 = vld [vmem:[#allocation7 + $0x8] sm:$0xf]
    %v237 = vld [vmem:[#allocation7 + $0xc] sm:$0xf]
    %v238 = vld [vmem:[#allocation7 + $0x10] sm:$0xf]
    %v239 = vld [vmem:[#allocation7 + $0x14] sm:$0xf]
    %v240 = vld [vmem:[#allocation7 + $0x18] sm:$0xf]
    %v241 = vld [vmem:[#allocation7 + $0x1c] sm:$0xf]
    %v242 = vld [vmem:[#allocation7 + $0x20] sm:$0xf]
    %v243 = vld [vmem:[#allocation7 + $0x24] sm:$0xf]
    %v244 = vld [vmem:[#allocation7 + $0x28] sm:$0xf]
    %v245 = vld [vmem:[#allocation7 + $0x2c] sm:$0xf]
    %v246 = vld [vmem:[#allocation7 + $0x30] sm:$0xf]
    %v247 = vld [vmem:[#allocation7 + $0x34] sm:$0xf]
    %v248 = vld [vmem:[#allocation7 + $0x38] sm:$0xf]
    %v249 = vld [vmem:[#allocation7 + $0x3c] sm:$0xf]
    %v250 = vld [vmem:[%s4] sm:$0x1]
    %v267 = vunpack.c.l.b16 %v234
    %v268 = vunpack.c.l.b16 %v235
    %v269 = vunpack.c.l.b16 %v236
    %v270 = vunpack.c.l.b16 %v237
    %v271 = vunpack.c.l.b16 %v238
    %v272 = vunpack.c.l.b16 %v239
    %v273 = vunpack.c.l.b16 %v240
    %v274 = vunpack.c.l.b16 %v241
    %v275 = vunpack.c.l.b16 %v242
    %v276 = vunpack.c.l.b16 %v243
    %v277 = vunpack.c.l.b16 %v244
    %v278 = vunpack.c.l.b16 %v245
    %v279 = vunpack.c.l.b16 %v246
    %v280 = vunpack.c.l.b16 %v247
    %v281 = vunpack.c.l.b16 %v248
    %v282 = vunpack.c.l.b16 %v249
    %v283 = vpack.c.b16 %v268, %v267
    %v284 = vpack.c.b16 %v270, %v269
    %v285 = vpack.c.b16 %v272, %v271
    %v286 = vpack.c.b16 %v274, %v273
    %v287 = vpack.c.b16 %v276, %v275
    %v288 = vpack.c.b16 %v278, %v277
    %v289 = vpack.c.b16 %v280, %v279
    %v290 = vpack.c.b16 %v282, %v281
    %299 = vmatprep.subr.bf16.mxu0 0
    %300 = vmatpush1.bf16.msra.mxu0 %v290
    %301 = vmatprep.subr.bf16.mxu0 0
    %302 = vmatpush1.bf16.msra.mxu0 %v289
    %303 = vmatprep.subr.bf16.mxu0 0
    %304 = vmatpush1.bf16.msra.mxu0 %v288
    %305 = vmatprep.subr.bf16.mxu0 0
    %306 = vmatpush1.bf16.msra.mxu0 %v287
    %307 = vmatprep.subr.bf16.mxu0 0
    %308 = vmatpush1.bf16.msra.mxu0 %v286
    %309 = vmatprep.subr.bf16.mxu0 0
    %310 = vmatpush1.bf16.msra.mxu0 %v285
    %311 = vmatprep.subr.bf16.mxu0 0
    %312 = vmatpush1.bf16.msra.mxu0 %v284
    %313 = vmatprep.subr.bf16.mxu0 0
    %314 = vmatpush1.bf16.msra.mxu0 %v283
    %315 = vmatprep.subr.bf16.mxu0 0
    %316 = vmatpush2.bf16.msra.mxu0 0
    %317 = vmatprep.subr.bf16.mxu0 0
    %318 = vmatpush2.bf16.msra.mxu0 0
    %319 = vmatprep.subr.bf16.mxu0 0
    %320 = vmatpush2.bf16.msra.mxu0 0
    %321 = vmatprep.subr.bf16.mxu0 0
    %322 = vmatpush2.bf16.msra.mxu0 0
    %323 = vmatprep.subr.bf16.mxu0 0
    %324 = vmatpush2.bf16.msra.mxu0 0
    %325 = vmatprep.subr.bf16.mxu0 0
    %326 = vmatpush2.bf16.msra.mxu0 0
    %327 = vmatprep.subr.bf16.mxu0 0
    %328 = vmatpush2.bf16.msra.mxu0 0
    %329 = vmatprep.subr.bf16.mxu0 0
    %330 = vmatpush2.bf16.msra.mxu0 0
    %331 = vmatprep.mubr.bf16.mxu0 0
    %332 = vmatmul.mubr.bf16.gmra.mxu0 %v233
    %v333 = vpop.f32.mrf.mxu0
    %v334 = vadd.f32 %v250, %v333
    %v335 = vpop.f32.mrf.mxu0
    %v336 = vpop.f32.mrf.mxu0
    %v337 = vpop.f32.mrf.mxu0
    %338 = vdwg.mxu0
    %v339 = vpack.c.bf16 %v334, %v334
    %vm340 = vcmask 1040384
    %vm341 = vsmask.f32 256
    %vm342 = vmand %vm340, %vm341
    %v343 = vld [vmem:[#allocation8] sm:$0x1]
    %v344 = vsel %vm342, %v339, %v343
    %345 = vst [vmem:[#allocation8] sm:$0x1] %v344
    // Predicated region
    $region34: #{tpu_custom_call.1} parent=1 // pred_check
      _
    $region35: #{tpu_custom_call.1} parent=1 // pred_check_branch
      %347 = sbr.rel (0) target = $region37
    $region36: #{tpu_custom_call.1} parent=1 // pred_region
      %s349 = ssub.s32 16, 16
      %350 = vsyncadd [#allocation4], %s349
      %s352 = sshll.u32 [#allocation8], 4
      %s353 = int_to_ptr.vmem [resolvable:$true] %s352
      %355 = dma.vmem_to_hbm [thread:$0]  %s353, 16, %s5, [#allocation4]
    $region37: #{tpu_custom_call.1} parent=1 // pred_fallthru
      _
    // Predicated region
    $region38: #{tpu_custom_call.1} parent=1 // pred_check
      _
    $region39: #{tpu_custom_call.1} parent=1 // pred_check_branch
      %357 = sbr.rel (0) target = $region41
    $region40: #{tpu_custom_call.1} parent=1 // pred_region
      %358 = dma.done [#allocation4], 16
    $region41: #{tpu_custom_call.1} parent=1 // pred_fallthru
      _
    %359 = vsyncpa [#allocation3], 1
    %360 = vsyncpa [#allocation6], 1
    %361 = vsyncpa [#allocation4], 1

</llo_original>
